<compile_context>
chip_gen: v5e
topology: v5e:2x2
jax: 0.10.0
libtpu: 0.0.40
codegen_flags: <defaults>
</compile_context>

<pallas_src>
import functools

import jax
import jax.numpy as jnp
from jax import lax
from jax.experimental import pallas as pl
from jax.experimental.pallas import tpu as pltpu


def _attention_kernel(x_ref, g_ref, b_ref, wqkv_ref, wo_ref, o_ref, *scratch,
                      heads, dim_head, block_q, eps, mm_dtype, single_tile):
    f32 = jnp.float32
    n = x_ref.shape[1]
    inner = heads * dim_head
    use_approx_recip = jnp.dtype(mm_dtype) != jnp.dtype(jnp.float32)
    qi = pl.program_id(1)

    def qkv_heads():
        # ---- LayerNorm over the full sequence (f32 stats, single-pass variance) ----
        x = x_ref[0].astype(f32)                                        # (N, D)
        mean = jnp.mean(x, axis=-1, keepdims=True)
        var = jnp.maximum(jnp.mean(x * x, axis=-1, keepdims=True) - mean * mean, 0.0)
        xn = (x - mean) * lax.rsqrt(var + eps)
        xn = (xn * g_ref[0].astype(f32) + b_ref[0].astype(f32)).astype(mm_dtype)
        # ---- fused QKV projection (softmax scale pre-folded into Q columns) ----
        qkv = jnp.dot(xn, wqkv_ref[...], preferred_element_type=f32).astype(mm_dtype)
        q, k, v = jnp.split(qkv, 3, axis=-1)                            # (N, inner) each
        # 'b n (h d) -> b h n d'
        to_heads = lambda t: jnp.transpose(t.reshape(n, heads, dim_head), (1, 0, 2))
        return to_heads(q), to_heads(k), to_heads(v)                    # (H, N, dh) each

    if single_tile:
        # Common ViT case (whole sequence in one q-tile): no scratch round-trip.
        qh, kh, vh = qkv_heads()
    else:
        q_scr, k_scr, v_scr = scratch

        @pl.when(qi == 0)
        def _():
            q_all, k_all, v_all = qkv_heads()
            q_scr[...] = q_all
            k_scr[...] = k_all
            v_scr[...] = v_all

        q_start = pl.multiple_of(qi * block_q, block_q)
        qh = q_scr[:, pl.ds(q_start, block_q), :]                       # (H, Tq, dh)
        kh = k_scr[...]                                                 # (H, N, dh)
        vh = v_scr[...]

    # ---- attention core, batched over heads (no explicit K transpose) ----
    # TODO(synk): for very large N add an inner KV-tile loop with online softmax
    #             (flash-style) instead of materializing the (H, Tq, N) score tile.
    s = jnp.einsum('hqd,hkd->hqk', qh, kh, preferred_element_type=f32)  # (H, Tq, N) f32
    s_max = jnp.max(s, axis=-1, keepdims=True)
    p = jnp.exp(s - s_max)                                              # f32 numerator
    l = jnp.sum(p, axis=-1, keepdims=True)                              # (H, Tq, 1)

    o_h = jnp.einsum('hqk,hkd->hqd', p.astype(mm_dtype), vh,
                     preferred_element_type=f32)                        # (H, Tq, dh) f32
    # deferred normalization: dh columns instead of N
    o_h = o_h * pl.reciprocal(l, approx=use_approx_recip)

    # 'b h n d -> b n (h d)'
    out = jnp.transpose(o_h, (1, 0, 2)).reshape(block_q, inner).astype(mm_dtype)

    # ---- output projection (no bias) ----
    y = jnp.dot(out, wo_ref[...], preferred_element_type=f32)           # (Tq, D)
    o_ref[0] = y.astype(o_ref.dtype)


def _choose_block_q(n, heads, max_tile=512, score_budget_bytes=8 * 1024 * 1024):
    # Cap the q-tile both by max_tile and by the f32 score-tile VMEM budget.
    per_row = heads * n * 4
    cap = int(min(max_tile, max(8, score_budget_bytes // max(per_row, 1))))
    if n <= cap:
        return n
    start = cap - (cap % 8)
    for cand in range(start, 7, -8):                                    # multiple of 8 dividing n
        if n % cand == 0:
            return cand
    return n                                                            # no divisor: full sequence


def attention_pallas(x, ln_gamma, ln_beta, w_qkv, w_out, *, heads, dim_head,
                     mm_dtype=jnp.bfloat16, max_q_tile=512):
    """x: (B, N, D). w_qkv: (D, 3*heads*dim_head). w_out: (heads*dim_head, D)."""
    B, N, D = x.shape
    inner = heads * dim_head
    assert w_qkv.shape == (D, 3 * inner) and w_out.shape == (inner, D)
    scale = dim_head ** (-0.5)
    mm_dtype = jnp.dtype(mm_dtype)

    block_q = _choose_block_q(N, heads, max_q_tile)
    num_q = N // block_q
    single_tile = (num_q == 1)

    # Parameter prep (outside the kernel, traced once): fold the softmax scale into the
    # Q columns of the fused QKV weight; cast matmul operands to the MXU dtype.
    wq, wk, wv = jnp.split(w_qkv, 3, axis=1)
    wqkv = jnp.concatenate([wq * scale, wk, wv], axis=1).astype(mm_dtype)
    wo = w_out.astype(mm_dtype)
    gamma2d = ln_gamma.reshape(1, D).astype(jnp.float32)
    beta2d = ln_beta.reshape(1, D).astype(jnp.float32)

    kernel = functools.partial(_attention_kernel, heads=heads, dim_head=dim_head,
                               block_q=block_q, eps=1e-5, mm_dtype=mm_dtype,
                               single_tile=single_tile)

    scratch_shapes = [] if single_tile else [
        pltpu.VMEM((heads, N, dim_head), mm_dtype),   # cached Q (all rows, head-major)
        pltpu.VMEM((heads, N, dim_head), mm_dtype),   # cached K
        pltpu.VMEM((heads, N, dim_head), mm_dtype),   # cached V
    ]

    return pl.pallas_call(
        kernel,
        out_shape=jax.ShapeDtypeStruct((B, N, D), x.dtype),
        grid_spec=pltpu.PrefetchScalarGridSpec(
            num_scalar_prefetch=0,
            grid=(B, num_q),
            in_specs=[
                pl.BlockSpec((1, N, D), lambda b, q: (b, 0, 0)),    # x: full sequence (read at q==0)
                pl.BlockSpec((1, D), lambda b, q: (0, 0)),          # LN gamma (constant)
                pl.BlockSpec((1, D), lambda b, q: (0, 0)),          # LN beta  (constant)
                pl.BlockSpec((D, 3 * inner), lambda b, q: (0, 0)),  # fused W_qkv (Q pre-scaled)
                pl.BlockSpec((inner, D), lambda b, q: (0, 0)),      # W_out
            ],
            out_specs=pl.BlockSpec((1, block_q, D), lambda b, q: (b, q, 0)),
            scratch_shapes=scratch_shapes,
        ),
        compiler_params=pltpu.CompilerParams(
            # q axis must run sequentially within each batch (scratch-cached QKV);
            # batch axis feeds v7x megacore.
            dimension_semantics=("parallel", "arbitrary"),
            vmem_limit_bytes=48 * 1024 * 1024,                      # safe on v5e/v6e/v7x
        ),
    )(x, gamma2d, beta2d, wqkv, wo)


def attention_reference(x, ln_gamma, ln_beta, w_qkv, w_out, *, heads, dim_head):
    B, N, D = x.shape
    inner = heads * dim_head
    scale = dim_head ** (-0.5)
    mean = jnp.mean(x, axis=-1, keepdims=True)
    var = jnp.mean((x - mean) ** 2, axis=-1, keepdims=True)
    xn = (x - mean) / jnp.sqrt(var + 1e-5) * ln_gamma + ln_beta
    qkv = xn @ w_qkv
    q, k, v = jnp.split(qkv, 3, axis=-1)

    def split_heads(t):  # (B, N, inner) -> (B, H, N, dh)
        return t.reshape(B, N, heads, dim_head).transpose(0, 2, 1, 3)

    q, k, v = map(split_heads, (q, k, v))
    dots = jnp.einsum('bhnd,bhmd->bhnm', q, k) * scale
    attn = jax.nn.softmax(dots, axis=-1)
    out = jnp.einsum('bhnm,bhmd->bhnd', attn, v)
    out = out.transpose(0, 2, 1, 3).reshape(B, N, inner)
    return out @ w_out


if __name__ == "__main__":
    B, N, D = 2, 8, 32
    heads, dim_head = 4, 16
    inner = heads * dim_head

    key = jax.random.PRNGKey(0)
    kx, kqkv, kout, kg, kb, kx2 = jax.random.split(key, 6)

    x = jax.random.normal(kx, (B, N, D), dtype=jnp.float32)
    # deterministic synthetic parameters (PyTorch Linear stores (out,in); we keep (in,out))
    w_qkv = jax.random.normal(kqkv, (D, 3 * inner), dtype=jnp.float32) * (D ** -0.5)
    w_out = jax.random.normal(kout, (inner, D), dtype=jnp.float32) * (inner ** -0.5)
    ln_gamma = jnp.ones((D,), jnp.float32) + 0.1 * jax.random.normal(kg, (D,), jnp.float32)
    ln_beta = 0.1 * jax.random.normal(kb, (D,), jnp.float32)

    y_ref = attention_reference(x, ln_gamma, ln_beta, w_qkv, w_out,
                                heads=heads, dim_head=dim_head)

    # Exact-precision path (f32 MXU operands, single q-tile): tight check vs reference.
    y_f32 = attention_pallas(x, ln_gamma, ln_beta, w_qkv, w_out,
                             heads=heads, dim_head=dim_head, mm_dtype=jnp.float32)
    y_f32 = jax.block_until_ready(y_f32)
    assert jnp.allclose(y_f32, y_ref, atol=1e-4, rtol=1e-4), "f32 path mismatch vs reference"

    # Default fast path (bf16 MXU operands, f32 accumulation / f32 softmax stats).
    y_bf16 = attention_pallas(x, ln_gamma, ln_beta, w_qkv, w_out,
                              heads=heads, dim_head=dim_head)
    y_bf16 = jax.block_until_ready(y_bf16)
    assert jnp.allclose(y_bf16, y_ref, atol=8e-2, rtol=8e-2), "bf16 path mismatch vs reference"

    # Exercise the q-tiled path (cached K/V scratch, multiple q-tiles) at f32 precision.
    N2 = 16
    x2 = jax.random.normal(kx2, (B, N2, D), dtype=jnp.float32)
    y2_ref = attention_reference(x2, ln_gamma, ln_beta, w_qkv, w_out,
                                 heads=heads, dim_head=dim_head)
    y2 = attention_pallas(x2, ln_gamma, ln_beta, w_qkv, w_out,
                          heads=heads, dim_head=dim_head,
                          mm_dtype=jnp.float32, max_q_tile=8)
    y2 = jax.block_until_ready(y2)
    assert jnp.allclose(y2, y2_ref, atol=1e-4, rtol=1e-4), "tiled path mismatch vs reference"

    print("KERNEL_OK")
</pallas_src>

<mosaic_0001>
module attributes {stable_mosaic.version = 11 : i64} {
  func.func @_attention_kernel(%arg0: i32, %arg1: i32, %arg2: memref<1x8x32xf32, #tpu.memory_space<vmem>>, %arg3: memref<1x32xf32, #tpu.memory_space<vmem>>, %arg4: memref<1x32xf32, #tpu.memory_space<vmem>>, %arg5: memref<32x192xf32, #tpu.memory_space<vmem>>, %arg6: memref<64x32xf32, #tpu.memory_space<vmem>>, %arg7: memref<1x8x32xf32, #tpu.memory_space<vmem>>) attributes {dimension_semantics = [#tpu.dimension_semantics<parallel>, #tpu.dimension_semantics<arbitrary>], iteration_bounds = array<i64: 2, 1>, scalar_prefetch = 0 : i64, scratch_operands = 0 : i64, tpu.core_type = #tpu.core_type<tc>, window_params = [{transform_indices = @transform_0, window_bounds = array<i64: 1, 8, 32>}, {pipeline_mode = #tpu.pipeline_mode<synchronous>, transform_indices = @transform_1, window_bounds = array<i64: 1, 32>}, {pipeline_mode = #tpu.pipeline_mode<synchronous>, transform_indices = @transform_2, window_bounds = array<i64: 1, 32>}, {pipeline_mode = #tpu.pipeline_mode<synchronous>, transform_indices = @transform_3, window_bounds = array<i64: 32, 192>}, {pipeline_mode = #tpu.pipeline_mode<synchronous>, transform_indices = @transform_4, window_bounds = array<i64: 64, 32>}, {transform_indices = @transform_5, window_bounds = array<i64: 1, 8, 32>}]} {
    %c0 = arith.constant 0 : index
    %c0_0 = arith.constant 0 : index
    %c0_1 = arith.constant 0 : index
    %0 = vector.load %arg2[%c0, %c0_0, %c0_1] : memref<1x8x32xf32, #tpu.memory_space<vmem>>, vector<1x8x32xf32>
    %1 = vector.shape_cast %0 : vector<1x8x32xf32> to vector<8x32xf32>
    %cst = arith.constant dense<0.000000e+00> : vector<8xf32>
    %2 = vector.multi_reduction <add>, %1, %cst [1] : vector<8x32xf32> to vector<8xf32>
    %3 = vector.shape_cast %2 : vector<8xf32> to vector<8x1xf32>
    %cst_2 = arith.constant 3.200000e+01 : f32
    %4 = vector.broadcast %cst_2 : f32 to vector<8x1xf32>
    %5 = arith.divf %3, %4 : vector<8x1xf32>
    %6 = arith.mulf %1, %1 : vector<8x32xf32>
    %cst_3 = arith.constant dense<0.000000e+00> : vector<8xf32>
    %7 = vector.multi_reduction <add>, %6, %cst_3 [1] : vector<8x32xf32> to vector<8xf32>
    %8 = vector.shape_cast %7 : vector<8xf32> to vector<8x1xf32>
    %cst_4 = arith.constant 3.200000e+01 : f32
    %9 = vector.broadcast %cst_4 : f32 to vector<8x1xf32>
    %10 = arith.divf %8, %9 : vector<8x1xf32>
    %11 = arith.mulf %5, %5 : vector<8x1xf32>
    %12 = arith.subf %10, %11 : vector<8x1xf32>
    %cst_5 = arith.constant 0.000000e+00 : f32
    %13 = vector.broadcast %cst_5 : f32 to vector<8x1xf32>
    %14 = arith.maximumf %12, %13 : vector<8x1xf32>
    %15 = vector.broadcast %5 : vector<8x1xf32> to vector<8x32xf32>
    %16 = arith.subf %1, %15 : vector<8x32xf32>
    %cst_6 = arith.constant 9.99999974E-6 : f32
    %17 = vector.broadcast %cst_6 : f32 to vector<8x1xf32>
    %18 = arith.addf %14, %17 : vector<8x1xf32>
    %19 = math.rsqrt %18 : vector<8x1xf32>
    %20 = vector.broadcast %19 : vector<8x1xf32> to vector<8x32xf32>
    %21 = arith.mulf %16, %20 : vector<8x32xf32>
    %c0_7 = arith.constant 0 : index
    %c0_8 = arith.constant 0 : index
    %22 = vector.load %arg3[%c0_7, %c0_8] : memref<1x32xf32, #tpu.memory_space<vmem>>, vector<1x32xf32>
    %23 = vector.shape_cast %22 : vector<1x32xf32> to vector<32xf32>
    %24 = vector.shape_cast %23 : vector<32xf32> to vector<1x32xf32>
    %25 = vector.broadcast %24 : vector<1x32xf32> to vector<8x32xf32>
    %26 = arith.mulf %21, %25 : vector<8x32xf32>
    %c0_9 = arith.constant 0 : index
    %c0_10 = arith.constant 0 : index
    %27 = vector.load %arg4[%c0_9, %c0_10] : memref<1x32xf32, #tpu.memory_space<vmem>>, vector<1x32xf32>
    %28 = vector.shape_cast %27 : vector<1x32xf32> to vector<32xf32>
    %29 = vector.shape_cast %28 : vector<32xf32> to vector<1x32xf32>
    %30 = vector.broadcast %29 : vector<1x32xf32> to vector<8x32xf32>
    %31 = arith.addf %26, %30 : vector<8x32xf32>
    %c0_11 = arith.constant 0 : index
    %c0_12 = arith.constant 0 : index
    %32 = vector.load %arg5[%c0_11, %c0_12] : memref<32x192xf32, #tpu.memory_space<vmem>>, vector<32x192xf32>
    %cst_13 = arith.constant dense<0.000000e+00> : vector<8x192xf32>
    %33 = tpu.matmul %31, %32, %cst_13 {dimension_numbers = #tpu.dot_dimension_numbers<[1], [0], [0], [1], [0, 0, 1, 1], [], []>} : vector<8x32xf32>, vector<32x192xf32>, vector<8x192xf32> -> vector<8x192xf32>
    %34 = vector.extract_strided_slice %33 {offsets = [0, 0], sizes = [8, 64], strides = [1, 1]} : vector<8x192xf32> to vector<8x64xf32>
    %35 = vector.extract_strided_slice %33 {offsets = [0, 64], sizes = [8, 64], strides = [1, 1]} : vector<8x192xf32> to vector<8x64xf32>
    %36 = vector.extract_strided_slice %33 {offsets = [0, 128], sizes = [8, 64], strides = [1, 1]} : vector<8x192xf32> to vector<8x64xf32>
    %37 = vector.shape_cast %34 : vector<8x64xf32> to vector<8x4x16xf32>
    %38 = tpu.transpose %37, [1, 0, 2] : vector<8x4x16xf32> -> vector<4x8x16xf32>
    %39 = vector.shape_cast %35 : vector<8x64xf32> to vector<8x4x16xf32>
    %40 = tpu.transpose %39, [1, 0, 2] : vector<8x4x16xf32> -> vector<4x8x16xf32>
    %41 = vector.shape_cast %36 : vector<8x64xf32> to vector<8x4x16xf32>
    %42 = tpu.transpose %41, [1, 0, 2] : vector<8x4x16xf32> -> vector<4x8x16xf32>
    "tpu.trace_start"() <{level = 10 : i32, message = "hqd,hkd->hqk"}> : () -> ()
    %cst_14 = arith.constant dense<0.000000e+00> : vector<4x8x8xf32>
    %43 = tpu.matmul %38, %40, %cst_14 {dimension_numbers = #tpu.dot_dimension_numbers<[2], [2], [1], [1], [0, 0, 0, 1, 1, 1], [0], [0]>} : vector<4x8x16xf32>, vector<4x8x16xf32>, vector<4x8x8xf32> -> vector<4x8x8xf32>
    "tpu.trace_stop"() : () -> ()
    %cst_15 = arith.constant dense<0xFF800000> : vector<4x8xf32>
    %44 = vector.multi_reduction <maximumf>, %43, %cst_15 [2] : vector<4x8x8xf32> to vector<4x8xf32>
    %45 = vector.shape_cast %44 : vector<4x8xf32> to vector<4x8x1xf32>
    %46 = vector.broadcast %45 : vector<4x8x1xf32> to vector<4x8x8xf32>
    %47 = arith.subf %43, %46 : vector<4x8x8xf32>
    %48 = math.exp %47 : vector<4x8x8xf32>
    %cst_16 = arith.constant dense<0.000000e+00> : vector<4x8xf32>
    %49 = vector.multi_reduction <add>, %48, %cst_16 [2] : vector<4x8x8xf32> to vector<4x8xf32>
    %50 = vector.shape_cast %49 : vector<4x8xf32> to vector<4x8x1xf32>
    "tpu.trace_start"() <{level = 10 : i32, message = "hqk,hkd->hqd"}> : () -> ()
    %cst_17 = arith.constant dense<0.000000e+00> : vector<4x8x16xf32>
    %51 = tpu.matmul %48, %42, %cst_17 {dimension_numbers = #tpu.dot_dimension_numbers<[2], [1], [1], [2], [0, 0, 0, 1, 1, 2], [0], [0]>} : vector<4x8x8xf32>, vector<4x8x16xf32>, vector<4x8x16xf32> -> vector<4x8x16xf32>
    "tpu.trace_stop"() : () -> ()
    %52 = tpu.reciprocal %50 : vector<4x8x1xf32> -> vector<4x8x1xf32>
    %53 = vector.broadcast %52 : vector<4x8x1xf32> to vector<4x8x16xf32>
    %54 = arith.mulf %51, %53 : vector<4x8x16xf32>
    %55 = tpu.transpose %54, [1, 0, 2] : vector<4x8x16xf32> -> vector<8x4x16xf32>
    %56 = vector.shape_cast %55 : vector<8x4x16xf32> to vector<8x64xf32>
    %c0_18 = arith.constant 0 : index
    %c0_19 = arith.constant 0 : index
    %57 = vector.load %arg6[%c0_18, %c0_19] : memref<64x32xf32, #tpu.memory_space<vmem>>, vector<64x32xf32>
    %cst_20 = arith.constant dense<0.000000e+00> : vector<8x32xf32>
    %58 = tpu.matmul %56, %57, %cst_20 {dimension_numbers = #tpu.dot_dimension_numbers<[1], [0], [0], [1], [0, 0, 1, 1], [], []>} : vector<8x64xf32>, vector<64x32xf32>, vector<8x32xf32> -> vector<8x32xf32>
    %c0_21 = arith.constant 0 : index
    %c0_22 = arith.constant 0 : index
    %c0_23 = arith.constant 0 : index
    %59 = vector.load %arg7[%c0_21, %c0_22, %c0_23] : memref<1x8x32xf32, #tpu.memory_space<vmem>>, vector<1x8x32xf32>
    %60 = vector.shape_cast %59 : vector<1x8x32xf32> to vector<8x32xf32>
    %61 = vector.shape_cast %58 : vector<8x32xf32> to vector<1x8x32xf32>
    tpu.vector_store %arg7[%c0_21, %c0_22, %c0_23], %61 {strides = array<i32>} : memref<1x8x32xf32, #tpu.memory_space<vmem>>, vector<1x8x32xf32>,
    return
  }
  func.func @transform_0(%arg0: i32, %arg1: i32) -> (i32, i32, i32) {
    %c0_i32 = arith.constant 0 : i32
    %c0_i32_0 = arith.constant 0 : i32
    %c0_i32_1 = arith.constant 0 : i32
    return %arg0, %c0_i32, %c0_i32_0 : i32, i32, i32
  }
  func.func @transform_1(%arg0: i32, %arg1: i32) -> (i32, i32) {
    %c0_i32 = arith.constant 0 : i32
    %c0_i32_0 = arith.constant 0 : i32
    %c0_i32_1 = arith.constant 0 : i32
    return %c0_i32, %c0_i32_0 : i32, i32
  }
  func.func @transform_2(%arg0: i32, %arg1: i32) -> (i32, i32) {
    %c0_i32 = arith.constant 0 : i32
    %c0_i32_0 = arith.constant 0 : i32
    %c0_i32_1 = arith.constant 0 : i32
    return %c0_i32, %c0_i32_0 : i32, i32
  }
  func.func @transform_3(%arg0: i32, %arg1: i32) -> (i32, i32) {
    %c0_i32 = arith.constant 0 : i32
    %c0_i32_0 = arith.constant 0 : i32
    %c0_i32_1 = arith.constant 0 : i32
    return %c0_i32, %c0_i32_0 : i32, i32
  }
  func.func @transform_4(%arg0: i32, %arg1: i32) -> (i32, i32) {
    %c0_i32 = arith.constant 0 : i32
    %c0_i32_0 = arith.constant 0 : i32
    %c0_i32_1 = arith.constant 0 : i32
    return %c0_i32, %c0_i32_0 : i32, i32
  }
  func.func @transform_5(%arg0: i32, %arg1: i32) -> (i32, i32, i32) {
    %c0_i32 = arith.constant 0 : i32
    %c0_i32_0 = arith.constant 0 : i32
    return %arg0, %arg1, %c0_i32 : i32, i32, i32
  }
}

</mosaic_0001>

<llo_original>
// kernel: tpu_custom_call.1
$region0: #{tpu_custom_call.1}
  #allocation0 [shape = 'u32[]', space=smem, size = 0x4, offset = 0x4, fixed_abs, tag = 'smem constant byte address 0x4 - core index']
  #allocation1 [shape = 'u32[72,128]{1,0:T(1,128)}', space=vmem, size = 0x9000, scoped, tag = 'internal scratch']
  %s0 = inlined_call_operand.vmem [shape: f32[2,8,32], index: 0, kind: input, shape index: {}]
  %s1 = inlined_call_operand.vmem [shape: f32[1,32], index: 1, kind: input, shape index: {}]
  %s2 = inlined_call_operand.vmem [shape: f32[1,32], index: 2, kind: input, shape index: {}]
  %s3 = inlined_call_operand.vmem [shape: f32[32,192], index: 3, kind: input, shape index: {}]
  %s4 = inlined_call_operand.vmem [shape: f32[64,32], index: 4, kind: input, shape index: {}]
  %s5 = inlined_call_operand.hbm [shape: f32[2,8,32], index: 5, kind: output, shape index: {}]
  %s6 = sld [smem:[#allocation0]]
  $region53: #{tpu_custom_call.1} parent=0
    _
  %s8 = ssub.s32 1, %s6
  %s9 = scalar_select 0, %s8, %s6
  $region1: #{tpu_custom_call.1} parent=0
    #allocation2 [shape = 'u8[8192]{0}', space=vmem, size = 0x2000, scoped, tag = 'output window, operand 0']
    #allocation3 [shape = 's32[2]{0}', space=sflag, size = 0x8, scoped, tag = 'scoped memory for tpu_custom_call.1']
    %10 = vsyncpa [#allocation3], 0
    %s11 = scalar_lea.sflag [#allocation3], 1
    %12 = vsyncpa %s11, 0
    loop: start=0, step=1, limit=4
    $region2: #{tpu_custom_call.1} parent=1 // loop_pre_header
      _
    $region3: #{tpu_custom_call.1} parent=1 // loop_header
      %s14 = sphi 0, %s18
      %p15 = scmp.ge.s32.totalorder %s14, 4
      %s21 = sphi 0, %s33
      %s22 = sphi 0, %s29
      %s23 = sphi 0, %s21
      %s24 = sphi 0, %s22
      %s25 = sphi 0, %s23
      %s26 = sphi 0, %s24
      %s36 = sphi 0, %s38
      %s39 = sphi 0, %s36
      %s40 = sphi 0, %s39
      %s56 = sphi 0, %s40
      %s60 = sphi 0, %s60
      %s62 = sphi 0, %s60
      %s63 = sphi 0, %s62
      %s77 = sphi 0, %s63
      %s81 = sphi 0, %s81
      %s83 = sphi 0, %s81
      %s84 = sphi 0, %s83
      %s98 = sphi 0, %s84
      %s102 = sphi 0, %s102
      %s104 = sphi 0, %s102
      %s105 = sphi 0, %s104
      %s119 = sphi 0, %s105
      %s123 = sphi 0, %s123
      %s125 = sphi 0, %s123
      %s126 = sphi 0, %s125
      %s140 = sphi 0, %s126
      %s148 = sphi 0, %s150
      %s151 = sphi 0, %s148
      %s152 = sphi 0, %s151
      %s168 = sphi 0, %s152
    $region4: #{tpu_custom_call.1} parent=1 // loop_header_branch
      %17 = sbr.rel (%p15) target = $region8
    $region5: #{tpu_custom_call.1} parent=1 // loop_body
      %s19 = ssub.s32 %s14, 1
      %s20 = ssub.s32 %s14, 2
      %s27 = sadd.s32 1, %s22
      %p28 = scmp.ge.s32.totalorder %s27, 1
      %s29 = scalar_select %p28, 0, %s27
      %s30 = sadd.s32 1, %s21
      %s31 = scalar_select %p28, %s30, %s21
      %p32 = scmp.ge.s32.totalorder %s31, 2
      %s33 = scalar_select %p32, 0, %s31
      %s34 = ssub.s32 %s21, %s33
      %p35 = scmp.eq.s32.totalorder %s34, 0
      %s37 = sadd.s32 %s36, 1
      %s38 = scalar_select %p35, %s36, %s37
      %p41 = pneg %p35
      %p42 = scmp.eq.s32.totalorder %s14, 1
      %p43 = por %p41, %p42
      %p44 = scmp.ne.s32.totalorder %s36, %s39
      %p45 = scmp.eq.s32.totalorder %s14, 0
      %p46 = por %p44, %p45
      %p47 = scmp.ne.s32.totalorder %s36, %s39
      %p48 = scmp.eq.s32.totalorder %s19, 1
      %p49 = por %p47, %p48
      %p50 = scmp.ne.s32.totalorder %s39, %s40
      %p51 = scmp.eq.s32.totalorder %s19, 0
      %p52 = por %p50, %p51
      %p53 = scmp.ne.s32.totalorder %s39, %s40
      %p54 = scmp.eq.s32.totalorder %s20, 1
      %p55 = por %p53, %p54
      %p57 = scmp.ne.s32.totalorder %s40, %s56
      %p58 = scmp.eq.s32.totalorder %s20, 0
      %p59 = por %p57, %p58
      %s61 = sadd.s32 %s60, 1
      %p64 = scmp.eq.s32.totalorder %s14, 1
      %p65 = scmp.ne.s32.totalorder %s60, %s62
      %p66 = scmp.eq.s32.totalorder %s14, 0
      %p67 = por %p65, %p66
      %p68 = scmp.ne.s32.totalorder %s60, %s62
      %p69 = scmp.eq.s32.totalorder %s19, 1
      %p70 = por %p68, %p69
      %p71 = scmp.ne.s32.totalorder %s62, %s63
      %p72 = scmp.eq.s32.totalorder %s19, 0
      %p73 = por %p71, %p72
      %p74 = scmp.ne.s32.totalorder %s62, %s63
      %p75 = scmp.eq.s32.totalorder %s20, 1
      %p76 = por %p74, %p75
      %p78 = scmp.ne.s32.totalorder %s63, %s77
      %p79 = scmp.eq.s32.totalorder %s20, 0
      %p80 = por %p78, %p79
      %s82 = sadd.s32 %s81, 1
      %p85 = scmp.eq.s32.totalorder %s14, 1
      %p86 = scmp.ne.s32.totalorder %s81, %s83
      %p87 = scmp.eq.s32.totalorder %s14, 0
      %p88 = por %p86, %p87
      %p89 = scmp.ne.s32.totalorder %s81, %s83
      %p90 = scmp.eq.s32.totalorder %s19, 1
      %p91 = por %p89, %p90
      %p92 = scmp.ne.s32.totalorder %s83, %s84
      %p93 = scmp.eq.s32.totalorder %s19, 0
      %p94 = por %p92, %p93
      %p95 = scmp.ne.s32.totalorder %s83, %s84
      %p96 = scmp.eq.s32.totalorder %s20, 1
      %p97 = por %p95, %p96
      %p99 = scmp.ne.s32.totalorder %s84, %s98
      %p100 = scmp.eq.s32.totalorder %s20, 0
      %p101 = por %p99, %p100
      %s103 = sadd.s32 %s102, 1
      %p106 = scmp.eq.s32.totalorder %s14, 1
      %p107 = scmp.ne.s32.totalorder %s102, %s104
      %p108 = scmp.eq.s32.totalorder %s14, 0
      %p109 = por %p107, %p108
      %p110 = scmp.ne.s32.totalorder %s102, %s104
      %p111 = scmp.eq.s32.totalorder %s19, 1
      %p112 = por %p110, %p111
      %p113 = scmp.ne.s32.totalorder %s104, %s105
      %p114 = scmp.eq.s32.totalorder %s19, 0
      %p115 = por %p113, %p114
      %p116 = scmp.ne.s32.totalorder %s104, %s105
      %p117 = scmp.eq.s32.totalorder %s20, 1
      %p118 = por %p116, %p117
      %p120 = scmp.ne.s32.totalorder %s105, %s119
      %p121 = scmp.eq.s32.totalorder %s20, 0
      %p122 = por %p120, %p121
      %s124 = sadd.s32 %s123, 1
      %p127 = scmp.eq.s32.totalorder %s14, 1
      %p128 = scmp.ne.s32.totalorder %s123, %s125
      %p129 = scmp.eq.s32.totalorder %s14, 0
      %p130 = por %p128, %p129
      %p131 = scmp.ne.s32.totalorder %s123, %s125
      %p132 = scmp.eq.s32.totalorder %s19, 1
      %p133 = por %p131, %p132
      %p134 = scmp.ne.s32.totalorder %s125, %s126
      %p135 = scmp.eq.s32.totalorder %s19, 0
      %p136 = por %p134, %p135
      %p137 = scmp.ne.s32.totalorder %s125, %s126
      %p138 = scmp.eq.s32.totalorder %s20, 1
      %p139 = por %p137, %p138
      %p141 = scmp.ne.s32.totalorder %s126, %s140
      %p142 = scmp.eq.s32.totalorder %s20, 0
      %p143 = por %p141, %p142
      %s144 = ssub.s32 %s21, %s33
      %s145 = ssub.s32 %s22, %s29
      %s146 = sor.u32 %s144, %s145
      %p147 = scmp.eq.s32.totalorder %s146, 0
      %s149 = sadd.s32 %s148, 1
      %s150 = scalar_select %p147, %s148, %s149
      %p153 = pneg %p147
      %p154 = scmp.eq.s32.totalorder %s14, 1
      %p155 = por %p153, %p154
      %p156 = scmp.ne.s32.totalorder %s148, %s151
      %p157 = scmp.eq.s32.totalorder %s14, 0
      %p158 = por %p156, %p157
      %p159 = scmp.ne.s32.totalorder %s148, %s151
      %p160 = scmp.eq.s32.totalorder %s19, 1
      %p161 = por %p159, %p160
      %p162 = scmp.ne.s32.totalorder %s151, %s152
      %p163 = scmp.eq.s32.totalorder %s19, 0
      %p164 = por %p162, %p163
      %p165 = scmp.ne.s32.totalorder %s151, %s152
      %p166 = scmp.eq.s32.totalorder %s20, 1
      %p167 = por %p165, %p166
      %p169 = scmp.ne.s32.totalorder %s152, %s168
      %p170 = scmp.eq.s32.totalorder %s20, 0
      %p171 = por %p169, %p170
      %p172 = scmp.le.s32.totalorder 1, %s14
      %p173 = scmp.lt.s32.totalorder %s14, 3
      %p174 = pnand %p172, %p173
      %p175 = pneg %p174
      // Predicated region
      $region9: #{tpu_custom_call.1} parent=5 // pred_check
        _
      $region10: #{tpu_custom_call.1} parent=5 // pred_check_branch
        %177 = sbr.rel (%p174) target = $region12
      $region11: #{tpu_custom_call.1} parent=5 // pred_region
        %s178 = ssub.s32 %s14, 1
        // Predicated region
        $region13: #{tpu_custom_call.1} parent=11 // pred_check
          %p179 = pneg %p73
        $region14: #{tpu_custom_call.1} parent=11 // pred_check_branch
          %181 = sbr.rel (%p179) target = $region16
        $region15: #{tpu_custom_call.1} parent=11 // pred_region
          _
        $region16: #{tpu_custom_call.1} parent=11 // pred_fallthru
          _
        // Predicated region
        $region17: #{tpu_custom_call.1} parent=11 // pred_check
          %p182 = pneg %p94
        $region18: #{tpu_custom_call.1} parent=11 // pred_check_branch
          %184 = sbr.rel (%p182) target = $region20
        $region19: #{tpu_custom_call.1} parent=11 // pred_region
          _
        $region20: #{tpu_custom_call.1} parent=11 // pred_fallthru
          _
        // Predicated region
        $region21: #{tpu_custom_call.1} parent=11 // pred_check
          %p185 = pneg %p115
        $region22: #{tpu_custom_call.1} parent=11 // pred_check_branch
          %187 = sbr.rel (%p185) target = $region24
        $region23: #{tpu_custom_call.1} parent=11 // pred_region
          _
        $region24: #{tpu_custom_call.1} parent=11 // pred_fallthru
          _
        // Predicated region
        $region25: #{tpu_custom_call.1} parent=11 // pred_check
          %p188 = pneg %p136
        $region26: #{tpu_custom_call.1} parent=11 // pred_check_branch
          %190 = sbr.rel (%p188) target = $region28
        $region27: #{tpu_custom_call.1} parent=11 // pred_region
          _
        $region28: #{tpu_custom_call.1} parent=11 // pred_fallthru
          _
      $region12: #{tpu_custom_call.1} parent=5 // pred_fallthru
        _
      %p191 = scmp.lt.s32.totalorder %s14, 2
      // Predicated region
      $region29: #{tpu_custom_call.1} parent=5 // pred_check
        %p192 = pneg %p191
      $region30: #{tpu_custom_call.1} parent=5 // pred_check_branch
        %194 = sbr.rel (%p192) target = $region32
      $region31: #{tpu_custom_call.1} parent=5 // pred_region
        // Predicated region
        $region33: #{tpu_custom_call.1} parent=31 // pred_check
          %p195 = pneg %p46
        $region34: #{tpu_custom_call.1} parent=31 // pred_check_branch
          %197 = sbr.rel (%p195) target = $region36
        $region35: #{tpu_custom_call.1} parent=31 // pred_region
          %p198 = scmp.lt.s32.totalorder %s21, 1
          %s199 = scalar_select %p198, %s21, 1
          %s200 = smul.addr %s199, 8
          %s201 = scalar_lea.vmem %s0, %s200
        $region36: #{tpu_custom_call.1} parent=31 // pred_fallthru
          _
      $region32: #{tpu_custom_call.1} parent=5 // pred_fallthru
        _
      %p202 = scmp.le.s32.totalorder 1, %s14
      %p203 = scmp.lt.s32.totalorder %s14, 3
      %p204 = pnand %p202, %p203
      %p205 = pneg %p204
      // Predicated region
      $region37: #{tpu_custom_call.1} parent=5 // pred_check
        _
      $region38: #{tpu_custom_call.1} parent=5 // pred_check_branch
        %207 = sbr.rel (%p204) target = $region40
      $region39: #{tpu_custom_call.1} parent=5 // pred_region
        %s208 = ssub.s32 %s14, 1
        %p209 = scmp.lt.s32.totalorder %s23, 1
        %s210 = scalar_select %p209, %s23, 1
        %s211 = smul.addr %s210, 8
        %s212 = scalar_lea.vmem %s0, %s211
        %p213 = pneg %p52
        %p214 = pneg %p49
        %p215 = pneg %p73
        %p216 = pneg %p70
        %p217 = pneg %p94
        %p218 = pneg %p91
        %p219 = pneg %p115
        %p220 = pneg %p112
        %p221 = pneg %p136
        %p222 = pneg %p133
        %p223 = pneg %p164
        %p224 = pneg %p161
        %s225 = sand.u32 %s151, 1
        %s226 = scalar_lea.sflag [#allocation3], %s225
        %s227 = sand.u32 %s151, 1
        %s228 = smul.addr %s227, 8
        %s229 = scalar_lea.vmem [#allocation2], %s228
        %p230 = scmp.lt.s32.totalorder %s23, 1
        %s231 = scalar_select %p230, %s23, 1
        %s232 = smul.addr %s231, 8
        %s233 = scalar_lea.vmem %s0, %s232
        %v234 = vld [vmem:[%s233] sm:$0xff]
        %vm235 = vcmask 261120
        %v236 = vsel %vm235, %v234, 0.0
        %237 = vadd.xlane.f32.xlu0 %v236
        %v238 = vpop.xlane.xlu0 %237
        %v239 = vrcp.pop 32.0
        %v240 = vmul.f32 32.0, %v239
        %v241 = vsub.f32 1.0, %v240
        %v242 = vmul.f32 %v239, %v241
        %v243 = vadd.f32 %v239, %v242
        %vm244 = vweird.f32 %v239
        %v245 = vsel %vm244, %v239, %v243
        %v246 = vmul.f32 %v238, %v245
        %v247 = vmul.f32 %v234, %v234
        %v248 = vsel %vm235, %v247, 0.0
        %249 = vadd.xlane.f32.xlu0 %v248
        %v250 = vpop.xlane.xlu0 %249
        %v251 = vmul.f32 %v250, %v245
        %v252 = vmul.f32 %v246, %v246
        %v253 = vsub.f32 %v251, %v252
        %v254 = vmax.f32 %v253, 0.0
        %v255 = vsub.f32 %v234, %v246
        %v256 = vadd.f32 %v254, 1e-05
        %v257 = vrsqrt.pop %v256
        %v258 = vmul.f32 %v257, %v256
        %v259 = vmul.f32 %v258, %v257
        %v260 = vmul.f32 0.5, %v259
        %v261 = vsub.f32 1.5, %v260
        %v262 = vmul.f32 %v257, %v261
        %vm263 = vweird.f32 %v256
        %vm264 = vweird.f32 %v257
        %vm265 = vmor %vm263, %vm264
        %v266 = vsel %vm265, %v257, %v262
        %v267 = vmul.f32 %v255, %v266
        %v268 = vld [vmem:[%s1] sm:$0x1]
        %v270 = vperm.slane %v268, 0
        %v272 = vmul.f32 %v267, %v270
        %v273 = vld [vmem:[%s2] sm:$0x1]
        %v275 = vperm.slane %v273, 0
        %v277 = vadd.f32 %v272, %v275
        %v278 = vld [vmem:[%s3] sm:$0xff]
        %v279 = vld [vmem:[%s3 + $0x8] sm:$0xff]
        %v280 = vld [vmem:[%s3 + $0x10] sm:$0xff]
        %v281 = vld [vmem:[%s3 + $0x18] sm:$0xff]
        %v282 = vld [vmem:[%s3 + $0x20] sm:$0xff]
        %v283 = vld [vmem:[%s3 + $0x28] sm:$0xff]
        %v284 = vld [vmem:[%s3 + $0x30] sm:$0xff]
        %v285 = vld [vmem:[%s3 + $0x38] sm:$0xff]
        %v287 = vsel %vm235, %v277, 0
        %289 = vmatpush.msra.mxu0 0.0
        %290 = vmatpush.msra.mxu0 0.0
        %291 = vmatpush.msra.mxu0 0.0
        %292 = vmatpush.msra.mxu0 0.0
        %293 = vmatpush.msra.mxu0 0.0
        %294 = vmatpush.msra.mxu0 0.0
        %295 = vmatpush.msra.mxu0 0.0
        %296 = vmatpush.msra.mxu0 0.0
        %297 = vmatpush.msra.mxu0 0.0
        %298 = vmatpush.msra.mxu0 0.0
        %299 = vmatpush.msra.mxu0 0.0
        %300 = vmatpush.msra.mxu0 0.0
        %301 = vmatpush.msra.mxu0 %v284
        %302 = vmatpush.msra.mxu0 %v282
        %303 = vmatpush.msra.mxu0 %v280
        %304 = vmatpush.msra.mxu0 %v278
        %305 = vmatmul.f32.gmra.mxu0 %v287
        %v306 = vpop.f32.mrf.mxu0
        %v307 = vadd.f32 0.0, %v306
        %308 = vdwg.mxu0
        %309 = vmatpush.msra.mxu0 0.0
        %310 = vmatpush.msra.mxu0 0.0
        %311 = vmatpush.msra.mxu0 0.0
        %312 = vmatpush.msra.mxu0 0.0
        %313 = vmatpush.msra.mxu0 0.0
        %314 = vmatpush.msra.mxu0 0.0
        %315 = vmatpush.msra.mxu0 0.0
        %316 = vmatpush.msra.mxu0 0.0
        %317 = vmatpush.msra.mxu0 0.0
        %318 = vmatpush.msra.mxu0 0.0
        %319 = vmatpush.msra.mxu0 0.0
        %320 = vmatpush.msra.mxu0 0.0
        %321 = vmatpush.msra.mxu0 %v285
        %322 = vmatpush.msra.mxu0 %v283
        %323 = vmatpush.msra.mxu0 %v281
        %324 = vmatpush.msra.mxu0 %v279
        %325 = vmatmul.f32.gmra.mxu0 %v287
        %v326 = vpop.f32.mrf.mxu0
        %v327 = vadd.f32 0.0, %v326
        %328 = vdwg.mxu0
        %330 = vrot.lane.b32.xlu0 %v307, 112
        %v331 = vpop.permute.xlu0 %330
        %333 = vrot.lane.b32.xlu0 %v307, 96
        %v334 = vpop.permute.xlu0 %333
        %336 = vrot.lane.b32.xlu0 %v307, 80
        %v337 = vpop.permute.xlu0 %336
        %v339 = vrot.slane %v334, 4
        %vm340 = vcmask 1047556
        %v341 = vsel %vm340, %v339, %v307
        %v342 = vrot.slane %v307, 4
        %v343 = vsel %vm340, %v334, %v342
        %v345 = vunpack.c.l.s4 1983009808
        %v346 = vunpack.c.0.s8 %v345
        %v347 = vperm.slane %v341, %v346
        %v349 = vunpack.c.l.s4 1983009808
        %v350 = vunpack.c.0.s8 %v349
        %v351 = vperm.slane %v343, %v350
        %v352 = vrot.slane %v337, 4
        %v353 = vsel %vm340, %v352, %v331
        %v354 = vrot.slane %v331, 4
        %v355 = vsel %vm340, %v337, %v354
        %v357 = vunpack.c.l.s4 1983009808
        %v358 = vunpack.c.0.s8 %v357
        %v359 = vperm.slane %v353, %v358
        %v361 = vunpack.c.l.s4 1983009808
        %v362 = vunpack.c.0.s8 %v361
        %v363 = vperm.slane %v355, %v362
        %v364 = vrot.slane %v359, 4
        %v365 = vsel %vm340, %v364, %v347
        %v366 = vrot.slane %v347, 4
        %v367 = vsel %vm340, %v359, %v366
        %v369 = vunpack.c.l.s4 1934713408
        %v370 = vunpack.c.0.s8 %v369
        %v371 = vperm.slane %v365, %v370
        %v373 = vunpack.c.l.s4 1934713408
        %v374 = vunpack.c.0.s8 %v373
        %v375 = vperm.slane %v367, %v374
        %v376 = vrot.slane %v363, 4
        %v377 = vsel %vm340, %v376, %v351
        %v378 = vrot.slane %v351, 4
        %v379 = vsel %vm340, %v363, %v378
        %v381 = vunpack.c.l.s4 1934713408
        %v382 = vunpack.c.0.s8 %v381
        %v383 = vperm.slane %v377, %v382
        %v385 = vunpack.c.l.s4 1934713408
        %v386 = vunpack.c.0.s8 %v385
        %v387 = vperm.slane %v379, %v386
        %v388 = vrot.slane %v371, 4
        %v389 = vsel %vm340, 0.0, %v388
        %v390 = vrot.slane %v375, 4
        %v391 = vsel %vm340, 0.0, %v390
        %v392 = vrot.slane %v383, 4
        %v393 = vsel %vm340, 0.0, %v392
        %v394 = vrot.slane %v387, 4
        %v395 = vsel %vm340, 0.0, %v394
        %v396 = vsel %vm340, %v390, %v371
        %v398 = vunpack.c.l.s4 1983009808
        %v399 = vunpack.c.0.s8 %v398
        %v400 = vperm.slane %v396, %v399
        %v401 = vrot.slane %v391, 4
        %v402 = vsel %vm340, %v401, %v389
        %v404 = vunpack.c.l.s4 1983009808
        %v405 = vunpack.c.0.s8 %v404
        %v406 = vperm.slane %v402, %v405
        %v407 = vsel %vm340, %v394, %v383
        %v409 = vunpack.c.l.s4 1983009808
        %v410 = vunpack.c.0.s8 %v409
        %v411 = vperm.slane %v407, %v410
        %v412 = vrot.slane %v395, 4
        %v413 = vsel %vm340, %v412, %v393
        %v415 = vunpack.c.l.s4 1983009808
        %v416 = vunpack.c.0.s8 %v415
        %v417 = vperm.slane %v413, %v416
        %v418 = vrot.slane %v406, 4
        %v419 = vsel %vm340, %v418, %v400
        %v420 = vrot.slane %v400, 4
        %v421 = vsel %vm340, %v406, %v420
        %v423 = vunpack.c.l.s4 1934713408
        %v424 = vunpack.c.0.s8 %v423
        %v425 = vperm.slane %v419, %v424
        %v427 = vunpack.c.l.s4 1934713408
        %v428 = vunpack.c.0.s8 %v427
        %v429 = vperm.slane %v421, %v428
        %v430 = vrot.slane %v417, 4
        %v431 = vsel %vm340, %v430, %v411
        %v432 = vrot.slane %v411, 4
        %v433 = vsel %vm340, %v417, %v432
        %v435 = vunpack.c.l.s4 1934713408
        %v436 = vunpack.c.0.s8 %v435
        %v437 = vperm.slane %v431, %v436
        %v439 = vunpack.c.l.s4 1934713408
        %v440 = vunpack.c.0.s8 %v439
        %v441 = vperm.slane %v433, %v440
        %v442 = vrot.slane %v437, 4
        %v443 = vsel %vm340, %v442, %v425
        %v444 = vrot.slane %v425, 4
        %v445 = vsel %vm340, %v437, %v444
        %v446 = vrot.slane %v441, 4
        %v447 = vsel %vm340, %v446, %v429
        %v448 = vrot.slane %v429, 4
        %v449 = vsel %vm340, %v441, %v448
        %450 = vrot.lane.b32.xlu0 %v307, 64
        %v451 = vpop.permute.xlu0 %450
        %452 = vrot.lane.b32.xlu0 %v331, 64
        %v453 = vpop.permute.xlu0 %452
        %454 = vrot.lane.b32.xlu0 %v334, 64
        %v455 = vpop.permute.xlu0 %454
        %456 = vrot.lane.b32.xlu0 %v337, 64
        %v457 = vpop.permute.xlu0 %456
        %v462 = vrot.slane %v455, 4
        %v463 = vsel %vm340, %v462, %v451
        %v464 = vrot.slane %v451, 4
        %v465 = vsel %vm340, %v455, %v464
        %v467 = vunpack.c.l.s4 1983009808
        %v468 = vunpack.c.0.s8 %v467
        %v469 = vperm.slane %v463, %v468
        %v471 = vunpack.c.l.s4 1983009808
        %v472 = vunpack.c.0.s8 %v471
        %v473 = vperm.slane %v465, %v472
        %v474 = vrot.slane %v457, 4
        %v475 = vsel %vm340, %v474, %v453
        %v476 = vrot.slane %v453, 4
        %v477 = vsel %vm340, %v457, %v476
        %v479 = vunpack.c.l.s4 1983009808
        %v480 = vunpack.c.0.s8 %v479
        %v481 = vperm.slane %v475, %v480
        %v483 = vunpack.c.l.s4 1983009808
        %v484 = vunpack.c.0.s8 %v483
        %v485 = vperm.slane %v477, %v484
        %v486 = vrot.slane %v481, 4
        %v487 = vsel %vm340, %v486, %v469
        %v488 = vrot.slane %v469, 4
        %v489 = vsel %vm340, %v481, %v488
        %v491 = vunpack.c.l.s4 1934713408
        %v492 = vunpack.c.0.s8 %v491
        %v493 = vperm.slane %v487, %v492
        %v495 = vunpack.c.l.s4 1934713408
        %v496 = vunpack.c.0.s8 %v495
        %v497 = vperm.slane %v489, %v496
        %v498 = vrot.slane %v485, 4
        %v499 = vsel %vm340, %v498, %v473
        %v500 = vrot.slane %v473, 4
        %v501 = vsel %vm340, %v485, %v500
        %v503 = vunpack.c.l.s4 1934713408
        %v504 = vunpack.c.0.s8 %v503
        %v505 = vperm.slane %v499, %v504
        %v507 = vunpack.c.l.s4 1934713408
        %v508 = vunpack.c.0.s8 %v507
        %v509 = vperm.slane %v501, %v508
        %v510 = vrot.slane %v493, 4
        %v511 = vsel %vm340, 0.0, %v510
        %v512 = vrot.slane %v497, 4
        %v513 = vsel %vm340, 0.0, %v512
        %v514 = vrot.slane %v505, 4
        %v515 = vsel %vm340, 0.0, %v514
        %v516 = vrot.slane %v509, 4
        %v517 = vsel %vm340, 0.0, %v516
        %v518 = vsel %vm340, %v512, %v493
        %v520 = vunpack.c.l.s4 1983009808
        %v521 = vunpack.c.0.s8 %v520
        %v522 = vperm.slane %v518, %v521
        %v523 = vrot.slane %v513, 4
        %v524 = vsel %vm340, %v523, %v511
        %v526 = vunpack.c.l.s4 1983009808
        %v527 = vunpack.c.0.s8 %v526
        %v528 = vperm.slane %v524, %v527
        %v529 = vsel %vm340, %v516, %v505
        %v531 = vunpack.c.l.s4 1983009808
        %v532 = vunpack.c.0.s8 %v531
        %v533 = vperm.slane %v529, %v532
        %v534 = vrot.slane %v517, 4
        %v535 = vsel %vm340, %v534, %v515
        %v537 = vunpack.c.l.s4 1983009808
        %v538 = vunpack.c.0.s8 %v537
        %v539 = vperm.slane %v535, %v538
        %v540 = vrot.slane %v528, 4
        %v541 = vsel %vm340, %v540, %v522
        %v542 = vrot.slane %v522, 4
        %v543 = vsel %vm340, %v528, %v542
        %v545 = vunpack.c.l.s4 1934713408
        %v546 = vunpack.c.0.s8 %v545
        %v547 = vperm.slane %v541, %v546
        %v549 = vunpack.c.l.s4 1934713408
        %v550 = vunpack.c.0.s8 %v549
        %v551 = vperm.slane %v543, %v550
        %v552 = vrot.slane %v539, 4
        %v553 = vsel %vm340, %v552, %v533
        %v554 = vrot.slane %v533, 4
        %v555 = vsel %vm340, %v539, %v554
        %v557 = vunpack.c.l.s4 1934713408
        %v558 = vunpack.c.0.s8 %v557
        %v559 = vperm.slane %v553, %v558
        %v561 = vunpack.c.l.s4 1934713408
        %v562 = vunpack.c.0.s8 %v561
        %v563 = vperm.slane %v555, %v562
        %v564 = vrot.slane %v559, 4
        %v565 = vsel %vm340, %v564, %v547
        %v566 = vrot.slane %v547, 4
        %v567 = vsel %vm340, %v559, %v566
        %v568 = vrot.slane %v563, 4
        %v569 = vsel %vm340, %v568, %v551
        %v570 = vrot.slane %v551, 4
        %v571 = vsel %vm340, %v563, %v570
        %573 = vrot.lane.b32.xlu0 %v327, 112
        %v574 = vpop.permute.xlu0 %573
        %576 = vrot.lane.b32.xlu0 %v327, 96
        %v577 = vpop.permute.xlu0 %576
        %579 = vrot.lane.b32.xlu0 %v327, 80
        %v580 = vpop.permute.xlu0 %579
        %v582 = vrot.slane %v577, 4
        %v583 = vsel %vm340, %v582, %v327
        %v584 = vrot.slane %v327, 4
        %v585 = vsel %vm340, %v577, %v584
        %v587 = vunpack.c.l.s4 1983009808
        %v588 = vunpack.c.0.s8 %v587
        %v589 = vperm.slane %v583, %v588
        %v591 = vunpack.c.l.s4 1983009808
        %v592 = vunpack.c.0.s8 %v591
        %v593 = vperm.slane %v585, %v592
        %v594 = vrot.slane %v580, 4
        %v595 = vsel %vm340, %v594, %v574
        %v596 = vrot.slane %v574, 4
        %v597 = vsel %vm340, %v580, %v596
        %v599 = vunpack.c.l.s4 1983009808
        %v600 = vunpack.c.0.s8 %v599
        %v601 = vperm.slane %v595, %v600
        %v603 = vunpack.c.l.s4 1983009808
        %v604 = vunpack.c.0.s8 %v603
        %v605 = vperm.slane %v597, %v604
        %v606 = vrot.slane %v601, 4
        %v607 = vsel %vm340, %v606, %v589
        %v608 = vrot.slane %v589, 4
        %v609 = vsel %vm340, %v601, %v608
        %v611 = vunpack.c.l.s4 1934713408
        %v612 = vunpack.c.0.s8 %v611
        %v613 = vperm.slane %v607, %v612
        %v615 = vunpack.c.l.s4 1934713408
        %v616 = vunpack.c.0.s8 %v615
        %v617 = vperm.slane %v609, %v616
        %v618 = vrot.slane %v605, 4
        %v619 = vsel %vm340, %v618, %v593
        %v620 = vrot.slane %v593, 4
        %v621 = vsel %vm340, %v605, %v620
        %v623 = vunpack.c.l.s4 1934713408
        %v624 = vunpack.c.0.s8 %v623
        %v625 = vperm.slane %v619, %v624
        %v627 = vunpack.c.l.s4 1934713408
        %v628 = vunpack.c.0.s8 %v627
        %v629 = vperm.slane %v621, %v628
        %v630 = vrot.slane %v613, 4
        %v631 = vsel %vm340, 0.0, %v630
        %v632 = vrot.slane %v617, 4
        %v633 = vsel %vm340, 0.0, %v632
        %v634 = vrot.slane %v625, 4
        %v635 = vsel %vm340, 0.0, %v634
        %v636 = vrot.slane %v629, 4
        %v637 = vsel %vm340, 0.0, %v636
        %v638 = vsel %vm340, %v632, %v613
        %v640 = vunpack.c.l.s4 1983009808
        %v641 = vunpack.c.0.s8 %v640
        %v642 = vperm.slane %v638, %v641
        %v643 = vrot.slane %v633, 4
        %v644 = vsel %vm340, %v643, %v631
        %v646 = vunpack.c.l.s4 1983009808
        %v647 = vunpack.c.0.s8 %v646
        %v648 = vperm.slane %v644, %v647
        %v649 = vsel %vm340, %v636, %v625
        %v651 = vunpack.c.l.s4 1983009808
        %v652 = vunpack.c.0.s8 %v651
        %v653 = vperm.slane %v649, %v652
        %v654 = vrot.slane %v637, 4
        %v655 = vsel %vm340, %v654, %v635
        %v657 = vunpack.c.l.s4 1983009808
        %v658 = vunpack.c.0.s8 %v657
        %v659 = vperm.slane %v655, %v658
        %v660 = vrot.slane %v648, 4
        %v661 = vsel %vm340, %v660, %v642
        %v662 = vrot.slane %v642, 4
        %v663 = vsel %vm340, %v648, %v662
        %v665 = vunpack.c.l.s4 1934713408
        %v666 = vunpack.c.0.s8 %v665
        %v667 = vperm.slane %v661, %v666
        %v669 = vunpack.c.l.s4 1934713408
        %v670 = vunpack.c.0.s8 %v669
        %v671 = vperm.slane %v663, %v670
        %v672 = vrot.slane %v659, 4
        %v673 = vsel %vm340, %v672, %v653
        %v674 = vrot.slane %v653, 4
        %v675 = vsel %vm340, %v659, %v674
        %v677 = vunpack.c.l.s4 1934713408
        %v678 = vunpack.c.0.s8 %v677
        %v679 = vperm.slane %v673, %v678
        %v681 = vunpack.c.l.s4 1934713408
        %v682 = vunpack.c.0.s8 %v681
        %v683 = vperm.slane %v675, %v682
        %v684 = vrot.slane %v679, 4
        %v685 = vsel %vm340, %v684, %v667
        %v686 = vrot.slane %v667, 4
        %v687 = vsel %vm340, %v679, %v686
        %v688 = vrot.slane %v683, 4
        %v689 = vsel %vm340, %v688, %v671
        %v690 = vrot.slane %v671, 4
        %v691 = vsel %vm340, %v683, %v690
        %vm692 = vcmask 130048
        %v694 = vsel %vm692, %v443, 0
        %v697 = vsel %vm692, %v565, 0
        %699 = vmatpush.xpose.msra.mxu0 0.0
        %700 = vmatpush.xpose.msra.mxu0 0.0
        %701 = vmatpush.xpose.msra.mxu0 0.0
        %702 = vmatpush.xpose.msra.mxu0 0.0
        %703 = vmatpush.xpose.msra.mxu0 0.0
        %704 = vmatpush.xpose.msra.mxu0 0.0
        %705 = vmatpush.xpose.msra.mxu0 0.0
        %706 = vmatpush.xpose.msra.mxu0 0.0
        %707 = vmatpush.xpose.msra.mxu0 0.0
        %708 = vmatpush.xpose.msra.mxu0 0.0
        %709 = vmatpush.xpose.msra.mxu0 0.0
        %710 = vmatpush.xpose.msra.mxu0 0.0
        %711 = vmatpush.xpose.msra.mxu0 0.0
        %712 = vmatpush.xpose.msra.mxu0 0.0
        %713 = vmatpush.xpose.msra.mxu0 0.0
        %714 = vmatpush.xpose.msra.mxu0 %v697
        %715 = vmatmul.f32.gmra.mxu0 %v694
        %v716 = vpop.f32.mrf.mxu0
        %v717 = vadd.f32 0.0, %v716
        %718 = vdwg.mxu0
        %v720 = vsel %vm692, %v445, 0
        %v723 = vsel %vm692, %v567, 0
        %725 = vmatpush.xpose.msra.mxu0 0.0
        %726 = vmatpush.xpose.msra.mxu0 0.0
        %727 = vmatpush.xpose.msra.mxu0 0.0
        %728 = vmatpush.xpose.msra.mxu0 0.0
        %729 = vmatpush.xpose.msra.mxu0 0.0
        %730 = vmatpush.xpose.msra.mxu0 0.0
        %731 = vmatpush.xpose.msra.mxu0 0.0
        %732 = vmatpush.xpose.msra.mxu0 0.0
        %733 = vmatpush.xpose.msra.mxu0 0.0
        %734 = vmatpush.xpose.msra.mxu0 0.0
        %735 = vmatpush.xpose.msra.mxu0 0.0
        %736 = vmatpush.xpose.msra.mxu0 0.0
        %737 = vmatpush.xpose.msra.mxu0 0.0
        %738 = vmatpush.xpose.msra.mxu0 0.0
        %739 = vmatpush.xpose.msra.mxu0 0.0
        %740 = vmatpush.xpose.msra.mxu0 %v723
        %741 = vmatmul.f32.gmra.mxu0 %v720
        %v742 = vpop.f32.mrf.mxu0
        %v743 = vadd.f32 0.0, %v742
        %744 = vdwg.mxu0
        %v746 = vsel %vm692, %v447, 0
        %v749 = vsel %vm692, %v569, 0
        %751 = vmatpush.xpose.msra.mxu0 0.0
        %752 = vmatpush.xpose.msra.mxu0 0.0
        %753 = vmatpush.xpose.msra.mxu0 0.0
        %754 = vmatpush.xpose.msra.mxu0 0.0
        %755 = vmatpush.xpose.msra.mxu0 0.0
        %756 = vmatpush.xpose.msra.mxu0 0.0
        %757 = vmatpush.xpose.msra.mxu0 0.0
        %758 = vmatpush.xpose.msra.mxu0 0.0
        %759 = vmatpush.xpose.msra.mxu0 0.0
        %760 = vmatpush.xpose.msra.mxu0 0.0
        %761 = vmatpush.xpose.msra.mxu0 0.0
        %762 = vmatpush.xpose.msra.mxu0 0.0
        %763 = vmatpush.xpose.msra.mxu0 0.0
        %764 = vmatpush.xpose.msra.mxu0 0.0
        %765 = vmatpush.xpose.msra.mxu0 0.0
        %766 = vmatpush.xpose.msra.mxu0 %v749
        %767 = vmatmul.f32.gmra.mxu0 %v746
        %v768 = vpop.f32.mrf.mxu0
        %v769 = vadd.f32 0.0, %v768
        %770 = vdwg.mxu0
        %v772 = vsel %vm692, %v449, 0
        %v775 = vsel %vm692, %v571, 0
        %777 = vmatpush.xpose.msra.mxu0 0.0
        %778 = vmatpush.xpose.msra.mxu0 0.0
        %779 = vmatpush.xpose.msra.mxu0 0.0
        %780 = vmatpush.xpose.msra.mxu0 0.0
        %781 = vmatpush.xpose.msra.mxu0 0.0
        %782 = vmatpush.xpose.msra.mxu0 0.0
        %783 = vmatpush.xpose.msra.mxu0 0.0
        %784 = vmatpush.xpose.msra.mxu0 0.0
        %785 = vmatpush.xpose.msra.mxu0 0.0
        %786 = vmatpush.xpose.msra.mxu0 0.0
        %787 = vmatpush.xpose.msra.mxu0 0.0
        %788 = vmatpush.xpose.msra.mxu0 0.0
        %789 = vmatpush.xpose.msra.mxu0 0.0
        %790 = vmatpush.xpose.msra.mxu0 0.0
        %791 = vmatpush.xpose.msra.mxu0 0.0
        %792 = vmatpush.xpose.msra.mxu0 %v775
        %793 = vmatmul.f32.gmra.mxu0 %v772
        %v794 = vpop.f32.mrf.mxu0
        %v795 = vadd.f32 0.0, %v794
        %796 = vdwg.mxu0
        %vm797 = vcmask 64512
        %v798 = vsel %vm797, %v717, -inf
        %799 = vmax.xlane.f32.xlu0 %v798
        %v800 = vpop.xlane.xlu0 %799
        %v801 = vsel %vm797, %v743, -inf
        %802 = vmax.xlane.f32.xlu0 %v801
        %v803 = vpop.xlane.xlu0 %802
        %v804 = vsel %vm797, %v769, -inf
        %805 = vmax.xlane.f32.xlu0 %v804
        %v806 = vpop.xlane.xlu0 %805
        %v807 = vsel %vm797, %v795, -inf
        %808 = vmax.xlane.f32.xlu0 %v807
        %v809 = vpop.xlane.xlu0 %808
        %v810 = vsub.f32 %v717, %v800
        %v811 = vsub.f32 %v743, %v803
        %v812 = vsub.f32 %v769, %v806
        %v813 = vsub.f32 %v795, %v809
        %v814 = vmul.f32 %v810, 1.442695
        %v815 = vpow.pop %v814
        %v816 = vmul.f32 %v811, 1.442695
        %v817 = vpow.pop %v816
        %v818 = vmul.f32 %v812, 1.442695
        %v819 = vpow.pop %v818
        %v820 = vmul.f32 %v813, 1.442695
        %v821 = vpow.pop %v820
        %v822 = vsel %vm797, %v815, 0.0
        %823 = vadd.xlane.f32.xlu0 %v822
        %v824 = vpop.xlane.xlu0 %823
        %v825 = vsel %vm797, %v817, 0.0
        %826 = vadd.xlane.f32.xlu0 %v825
        %v827 = vpop.xlane.xlu0 %826
        %v828 = vsel %vm797, %v819, 0.0
        %829 = vadd.xlane.f32.xlu0 %v828
        %v830 = vpop.xlane.xlu0 %829
        %v831 = vsel %vm797, %v821, 0.0
        %832 = vadd.xlane.f32.xlu0 %v831
        %v833 = vpop.xlane.xlu0 %832
        %v835 = vsel %vm797, %v815, 0
        %837 = vmatpush.msra.mxu0 0.0
        %838 = vmatpush.msra.mxu0 0.0
        %839 = vmatpush.msra.mxu0 0.0
        %840 = vmatpush.msra.mxu0 0.0
        %841 = vmatpush.msra.mxu0 0.0
        %842 = vmatpush.msra.mxu0 0.0
        %843 = vmatpush.msra.mxu0 0.0
        %844 = vmatpush.msra.mxu0 0.0
        %845 = vmatpush.msra.mxu0 0.0
        %846 = vmatpush.msra.mxu0 0.0
        %847 = vmatpush.msra.mxu0 0.0
        %848 = vmatpush.msra.mxu0 0.0
        %849 = vmatpush.msra.mxu0 0.0
        %850 = vmatpush.msra.mxu0 0.0
        %851 = vmatpush.msra.mxu0 0.0
        %852 = vmatpush.msra.mxu0 %v685
        %853 = vmatmul.f32.gmra.mxu0 %v835
        %v854 = vpop.f32.mrf.mxu0
        %v855 = vadd.f32 0.0, %v854
        %856 = vdwg.mxu0
        %v858 = vsel %vm797, %v817, 0
        %860 = vmatpush.msra.mxu0 0.0
        %861 = vmatpush.msra.mxu0 0.0
        %862 = vmatpush.msra.mxu0 0.0
        %863 = vmatpush.msra.mxu0 0.0
        %864 = vmatpush.msra.mxu0 0.0
        %865 = vmatpush.msra.mxu0 0.0
        %866 = vmatpush.msra.mxu0 0.0
        %867 = vmatpush.msra.mxu0 0.0
        %868 = vmatpush.msra.mxu0 0.0
        %869 = vmatpush.msra.mxu0 0.0
        %870 = vmatpush.msra.mxu0 0.0
        %871 = vmatpush.msra.mxu0 0.0
        %872 = vmatpush.msra.mxu0 0.0
        %873 = vmatpush.msra.mxu0 0.0
        %874 = vmatpush.msra.mxu0 0.0
        %875 = vmatpush.msra.mxu0 %v687
        %876 = vmatmul.f32.gmra.mxu0 %v858
        %v877 = vpop.f32.mrf.mxu0
        %v878 = vadd.f32 0.0, %v877
        %879 = vdwg.mxu0
        %v881 = vsel %vm797, %v819, 0
        %883 = vmatpush.msra.mxu0 0.0
        %884 = vmatpush.msra.mxu0 0.0
        %885 = vmatpush.msra.mxu0 0.0
        %886 = vmatpush.msra.mxu0 0.0
        %887 = vmatpush.msra.mxu0 0.0
        %888 = vmatpush.msra.mxu0 0.0
        %889 = vmatpush.msra.mxu0 0.0
        %890 = vmatpush.msra.mxu0 0.0
        %891 = vmatpush.msra.mxu0 0.0
        %892 = vmatpush.msra.mxu0 0.0
        %893 = vmatpush.msra.mxu0 0.0
        %894 = vmatpush.msra.mxu0 0.0
        %895 = vmatpush.msra.mxu0 0.0
        %896 = vmatpush.msra.mxu0 0.0
        %897 = vmatpush.msra.mxu0 0.0
        %898 = vmatpush.msra.mxu0 %v689
        %899 = vmatmul.f32.gmra.mxu0 %v881
        %v900 = vpop.f32.mrf.mxu0
        %v901 = vadd.f32 0.0, %v900
        %902 = vdwg.mxu0
        %v904 = vsel %vm797, %v821, 0
        %906 = vmatpush.msra.mxu0 0.0
        %907 = vmatpush.msra.mxu0 0.0
        %908 = vmatpush.msra.mxu0 0.0
        %909 = vmatpush.msra.mxu0 0.0
        %910 = vmatpush.msra.mxu0 0.0
        %911 = vmatpush.msra.mxu0 0.0
        %912 = vmatpush.msra.mxu0 0.0
        %913 = vmatpush.msra.mxu0 0.0
        %914 = vmatpush.msra.mxu0 0.0
        %915 = vmatpush.msra.mxu0 0.0
        %916 = vmatpush.msra.mxu0 0.0
        %917 = vmatpush.msra.mxu0 0.0
        %918 = vmatpush.msra.mxu0 0.0
        %919 = vmatpush.msra.mxu0 0.0
        %920 = vmatpush.msra.mxu0 0.0
        %921 = vmatpush.msra.mxu0 %v691
        %922 = vmatmul.f32.gmra.mxu0 %v904
        %v923 = vpop.f32.mrf.mxu0
        %v924 = vadd.f32 0.0, %v923
        %925 = vdwg.mxu0
        %v926 = vrcp.pop %v824
        %v927 = vmul.f32 %v824, %v926
        %v928 = vsub.f32 1.0, %v927
        %v929 = vmul.f32 %v926, %v928
        %v930 = vadd.f32 %v926, %v929
        %vm931 = vweird.f32 %v824
        %vm932 = vweird.f32 %v926
        %vm933 = vmor %vm931, %vm932
        %v934 = vsel %vm933, %v926, %v930
        %v935 = vand.u32 2147483647, %v824
        %vm936 = vcmp.eq.f32.partialorder %v935, 8.507059e+37
        %v937 = vand.u32 %v824, 2147483648
        %v938 = vor.u32 1.1754944e-38, %v937
        %v939 = vsel %vm936, %v938, %v934
        %v940 = vrcp.pop %v827
        %v941 = vmul.f32 %v827, %v940
        %v942 = vsub.f32 1.0, %v941
        %v943 = vmul.f32 %v940, %v942
        %v944 = vadd.f32 %v940, %v943
        %vm945 = vweird.f32 %v827
        %vm946 = vweird.f32 %v940
        %vm947 = vmor %vm945, %vm946
        %v948 = vsel %vm947, %v940, %v944
        %v949 = vand.u32 2147483647, %v827
        %vm950 = vcmp.eq.f32.partialorder %v949, 8.507059e+37
        %v951 = vand.u32 %v827, 2147483648
        %v952 = vor.u32 1.1754944e-38, %v951
        %v953 = vsel %vm950, %v952, %v948
        %v954 = vrcp.pop %v830
        %v955 = vmul.f32 %v830, %v954
        %v956 = vsub.f32 1.0, %v955
        %v957 = vmul.f32 %v954, %v956
        %v958 = vadd.f32 %v954, %v957
        %vm959 = vweird.f32 %v830
        %vm960 = vweird.f32 %v954
        %vm961 = vmor %vm959, %vm960
        %v962 = vsel %vm961, %v954, %v958
        %v963 = vand.u32 2147483647, %v830
        %vm964 = vcmp.eq.f32.partialorder %v963, 8.507059e+37
        %v965 = vand.u32 %v830, 2147483648
        %v966 = vor.u32 1.1754944e-38, %v965
        %v967 = vsel %vm964, %v966, %v962
        %v968 = vrcp.pop %v833
        %v969 = vmul.f32 %v833, %v968
        %v970 = vsub.f32 1.0, %v969
        %v971 = vmul.f32 %v968, %v970
        %v972 = vadd.f32 %v968, %v971
        %vm973 = vweird.f32 %v833
        %vm974 = vweird.f32 %v968
        %vm975 = vmor %vm973, %vm974
        %v976 = vsel %vm975, %v968, %v972
        %v977 = vand.u32 2147483647, %v833
        %vm978 = vcmp.eq.f32.partialorder %v977, 8.507059e+37
        %v979 = vand.u32 %v833, 2147483648
        %v980 = vor.u32 1.1754944e-38, %v979
        %v981 = vsel %vm978, %v980, %v976
        %v982 = vmul.f32 %v855, %v939
        %v983 = vmul.f32 %v878, %v953
        %v984 = vmul.f32 %v901, %v967
        %v985 = vmul.f32 %v924, %v981
        %v986 = vrot.slane %v984, 4
        %v987 = vsel %vm340, %v986, %v982
        %v988 = vrot.slane %v982, 4
        %v989 = vsel %vm340, %v984, %v988
        %v991 = vunpack.c.l.s4 1983009808
        %v992 = vunpack.c.0.s8 %v991
        %v993 = vperm.slane %v987, %v992
        %v995 = vunpack.c.l.s4 1983009808
        %v996 = vunpack.c.0.s8 %v995
        %v997 = vperm.slane %v989, %v996
        %v998 = vrot.slane %v985, 4
        %v999 = vsel %vm340, %v998, %v983
        %v1000 = vrot.slane %v983, 4
        %v1001 = vsel %vm340, %v985, %v1000
        %v1003 = vunpack.c.l.s4 1983009808
        %v1004 = vunpack.c.0.s8 %v1003
        %v1005 = vperm.slane %v999, %v1004
        %v1007 = vunpack.c.l.s4 1983009808
        %v1008 = vunpack.c.0.s8 %v1007
        %v1009 = vperm.slane %v1001, %v1008
        %v1010 = vrot.slane %v1005, 4
        %v1011 = vsel %vm340, %v1010, %v993
        %v1012 = vrot.slane %v993, 4
        %v1013 = vsel %vm340, %v1005, %v1012
        %v1015 = vunpack.c.l.s4 1934713408
        %v1016 = vunpack.c.0.s8 %v1015
        %v1017 = vperm.slane %v1011, %v1016
        %v1019 = vunpack.c.l.s4 1934713408
        %v1020 = vunpack.c.0.s8 %v1019
        %v1021 = vperm.slane %v1013, %v1020
        %v1022 = vrot.slane %v1009, 4
        %v1023 = vsel %vm340, %v1022, %v997
        %v1024 = vrot.slane %v997, 4
        %v1025 = vsel %vm340, %v1009, %v1024
        %v1027 = vunpack.c.l.s4 1934713408
        %v1028 = vunpack.c.0.s8 %v1027
        %v1029 = vperm.slane %v1023, %v1028
        %v1031 = vunpack.c.l.s4 1934713408
        %v1032 = vunpack.c.0.s8 %v1031
        %v1033 = vperm.slane %v1025, %v1032
        %v1034 = vrot.slane %v1017, 4
        %v1035 = vsel %vm340, 0.0, %v1034
        %v1036 = vrot.slane %v1021, 4
        %v1037 = vsel %vm340, 0.0, %v1036
        %v1038 = vrot.slane %v1029, 4
        %v1039 = vsel %vm340, 0.0, %v1038
        %v1040 = vrot.slane %v1033, 4
        %v1041 = vsel %vm340, 0.0, %v1040
        %v1042 = vsel %vm340, %v1036, %v1017
        %v1044 = vunpack.c.l.s4 1983009808
        %v1045 = vunpack.c.0.s8 %v1044
        %v1046 = vperm.slane %v1042, %v1045
        %v1047 = vrot.slane %v1037, 4
        %v1048 = vsel %vm340, %v1047, %v1035
        %v1050 = vunpack.c.l.s4 1983009808
        %v1051 = vunpack.c.0.s8 %v1050
        %v1052 = vperm.slane %v1048, %v1051
        %v1053 = vsel %vm340, %v1040, %v1029
        %v1055 = vunpack.c.l.s4 1983009808
        %v1056 = vunpack.c.0.s8 %v1055
        %v1057 = vperm.slane %v1053, %v1056
        %v1058 = vrot.slane %v1041, 4
        %v1059 = vsel %vm340, %v1058, %v1039
        %v1061 = vunpack.c.l.s4 1983009808
        %v1062 = vunpack.c.0.s8 %v1061
        %v1063 = vperm.slane %v1059, %v1062
        %v1064 = vrot.slane %v1052, 4
        %v1065 = vsel %vm340, %v1064, %v1046
        %v1066 = vrot.slane %v1046, 4
        %v1067 = vsel %vm340, %v1052, %v1066
        %v1069 = vunpack.c.l.s4 1934713408
        %v1070 = vunpack.c.0.s8 %v1069
        %v1071 = vperm.slane %v1065, %v1070
        %v1073 = vunpack.c.l.s4 1934713408
        %v1074 = vunpack.c.0.s8 %v1073
        %v1075 = vperm.slane %v1067, %v1074
        %v1076 = vrot.slane %v1063, 4
        %v1077 = vsel %vm340, %v1076, %v1057
        %v1078 = vrot.slane %v1057, 4
        %v1079 = vsel %vm340, %v1063, %v1078
        %v1081 = vunpack.c.l.s4 1934713408
        %v1082 = vunpack.c.0.s8 %v1081
        %v1083 = vperm.slane %v1077, %v1082
        %v1085 = vunpack.c.l.s4 1934713408
        %v1086 = vunpack.c.0.s8 %v1085
        %v1087 = vperm.slane %v1079, %v1086
        %v1088 = vrot.slane %v1083, 4
        %v1089 = vsel %vm340, %v1088, %v1071
        %v1090 = vrot.slane %v1071, 4
        %v1091 = vsel %vm340, %v1083, %v1090
        %v1092 = vrot.slane %v1087, 4
        %v1093 = vsel %vm340, %v1092, %v1075
        %v1094 = vrot.slane %v1075, 4
        %v1095 = vsel %vm340, %v1087, %v1094
        %1097 = vrot.lane.b32.xlu0 %v1091, 16
        %v1098 = vpop.permute.xlu0 %1097
        %1101 = vrot.lane.b32.xlu0 %v1093, 32
        %v1102 = vpop.permute.xlu0 %1101
        %1105 = vrot.lane.b32.xlu0 %v1095, 48
        %v1106 = vpop.permute.xlu0 %1105
        %v1108 = vsel %vm692, %v1089, %v1098
        %v1109 = vsel %vm235, %v1108, %v1102
        %vm1110 = vcmask 392192
        %v1111 = vsel %vm1110, %v1109, %v1106
        %v1112 = vld [vmem:[%s4] sm:$0xff]
        %v1113 = vld [vmem:[%s4 + $0x8] sm:$0xff]
        %v1114 = vld [vmem:[%s4 + $0x10] sm:$0xff]
        %v1115 = vld [vmem:[%s4 + $0x18] sm:$0xff]
        %v1116 = vld [vmem:[%s4 + $0x20] sm:$0xff]
        %v1117 = vld [vmem:[%s4 + $0x28] sm:$0xff]
        %v1118 = vld [vmem:[%s4 + $0x30] sm:$0xff]
        %v1119 = vld [vmem:[%s4 + $0x38] sm:$0xff]
        %vm1120 = vcmask 523264
        %v1122 = vsel %vm1120, %v1111, 0
        %1124 = vmatpush.msra.mxu0 0.0
        %1125 = vmatpush.msra.mxu0 0.0
        %1126 = vmatpush.msra.mxu0 0.0
        %1127 = vmatpush.msra.mxu0 0.0
        %1128 = vmatpush.msra.mxu0 0.0
        %1129 = vmatpush.msra.mxu0 0.0
        %1130 = vmatpush.msra.mxu0 0.0
        %1131 = vmatpush.msra.mxu0 0.0
        %1132 = vmatpush.msra.mxu0 %v1119
        %1133 = vmatpush.msra.mxu0 %v1118
        %1134 = vmatpush.msra.mxu0 %v1117
        %1135 = vmatpush.msra.mxu0 %v1116
        %1136 = vmatpush.msra.mxu0 %v1115
        %1137 = vmatpush.msra.mxu0 %v1114
        %1138 = vmatpush.msra.mxu0 %v1113
        %1139 = vmatpush.msra.mxu0 %v1112
        %1140 = vmatmul.f32.gmra.mxu0 %v1122
        %v1141 = vpop.f32.mrf.mxu0
        %v1142 = vadd.f32 0.0, %v1141
        %1143 = vdwg.mxu0
        %1144 = vst.msk [vmem:[%s229] sm:$0xff] %vm235, %v1142
        %s1145 = sand.u32 %s151, 1
        %s1146 = scalar_lea.sflag [#allocation3], %s1145
        %s1147 = sand.u32 %s151, 1
        %s1148 = smul.addr %s1147, 8
        %s1149 = scalar_lea.vmem [#allocation2], %s1148
        // Predicated region
        $region41: #{tpu_custom_call.1} parent=39 // pred_check
          %p1150 = pneg %p161
        $region42: #{tpu_custom_call.1} parent=39 // pred_check_branch
          %1152 = sbr.rel (%p1150) target = $region44
        $region43: #{tpu_custom_call.1} parent=39 // pred_region
          %1154 = vsyncadd %s1146, 0
          %s1155 = sadd.s32 %s24, %s23
          %s1156 = smul.addr %s1155, 8
          %s1157 = scalar_lea.hbm %s5, %s1156
          %s1159 = sshll.u32 %s1149, 4
          %s1160 = int_to_ptr.vmem [resolvable:$true] %s1159
          %s1161 = sshll.u32 %s1157, 4
          %s1162 = int_to_ptr.hbm [resolvable:$true] %s1161
          %1164 = dma.vmem_to_hbm [thread:$0]  %s1160, 128, %s1162, %s1146
        $region44: #{tpu_custom_call.1} parent=39 // pred_fallthru
          _
      $region40: #{tpu_custom_call.1} parent=5 // pred_fallthru
        _
      %p1165 = scmp.le.s32.totalorder 2, %s14
      // Predicated region
      $region45: #{tpu_custom_call.1} parent=5 // pred_check
        %p1166 = pneg %p1165
      $region46: #{tpu_custom_call.1} parent=5 // pred_check_branch
        %1168 = sbr.rel (%p1166) target = $region48
      $region47: #{tpu_custom_call.1} parent=5 // pred_region
        %s1169 = ssub.s32 %s14, 2
        // Predicated region
        $region49: #{tpu_custom_call.1} parent=47 // pred_check
          %p1170 = pneg %p167
        $region50: #{tpu_custom_call.1} parent=47 // pred_check_branch
          %1172 = sbr.rel (%p1170) target = $region52
        $region51: #{tpu_custom_call.1} parent=47 // pred_region
          %s1173 = sand.u32 %s152, 1
          %s1174 = scalar_lea.sflag [#allocation3], %s1173
          %s1175 = sand.u32 %s152, 1
          %s1176 = smul.addr %s1175, 8
          %s1177 = scalar_lea.vmem [#allocation2], %s1176
          %1179 = dma.done %s1174, 128
        $region52: #{tpu_custom_call.1} parent=47 // pred_fallthru
          _
      $region48: #{tpu_custom_call.1} parent=5 // pred_fallthru
        _
    $region6: #{tpu_custom_call.1} parent=1 // loop_footer
      %s18 = sadd.s32 1, %s14
    $region7: #{tpu_custom_call.1} parent=1 // loop_footer_branch
      %13 = sbr.rel target = $region3
    $region8: #{tpu_custom_call.1} parent=1 // loop_exit
      _
    %1180 = vsyncpa [#allocation3], 1
    %s1181 = scalar_lea.sflag [#allocation3], 1
    %1182 = vsyncpa %s1181, 1

</llo_original>
